<compile_context>
chip_gen: v6e
topology: v6e:2x2x1
jax: 0.10.0
libtpu: 0.0.40
codegen_flags: <defaults>
</compile_context>

<pallas_src>
import functools

import jax
import jax.numpy as jnp
from jax.experimental import pallas as pl
from jax.experimental.pallas import tpu as pltpu


_BLOCK_BYTES_BUDGET = 24 * 1024 * 1024   # budget for live data blocks in VMEM
_VMEM_LIMIT = 40 * 1024 * 1024           # scoped VMEM limit (< 64 MiB v7x phys)


def _round_up(v, m):
    return ((v + m - 1) // m) * m


def _block_cost(c, t):
    # x, r, out double-buffered plus |x-r| / gate intermediates -> ~8 live blocks.
    return 8 * c * t * 4


def _pick_hw_tile(hw, c, cap=None):
    """Largest multiple-of-128 divisor of hw within the VMEM budget (0 if none)."""
    limit = max(128, _BLOCK_BYTES_BUDGET // (8 * c * 4))
    if cap is not None:
        limit = min(limit, cap)
    best, t = 0, 128
    while t <= hw:
        if hw % t == 0 and t <= limit:
            best = t
        t += 128
    return best


# ---------------------------------------------------------------------------
# Pallas kernels
# ---------------------------------------------------------------------------
def _aff_single_kernel(x_ref, r_ref, w2_ref, b_ref, o_ref):
    """Fully fused AFF for one batch image (NCHW-native, H*W on the lane axis).

    x_ref, r_ref, o_ref : (1, C, HW)
    w2_ref              : (2, C)  row 0: folded local 1x1 weight
                                  row 1: folded global 1x1 weight / (H*W)
    b_ref               : (1, 1)  folded local + global bias
    """
    x = x_ref[0]
    r = r_ref[0]
    xa = jnp.abs(x - r)                                                 # (C, HW)
    g = jnp.dot(w2_ref[...], xa, preferred_element_type=jnp.float32)   # (2, HW)
    xl = g[0:1, :]                                                      # (1, HW)
    xg = jnp.sum(g[1:2, :], axis=1, keepdims=True)                     # (1, 1)
    wei = 1.0 / (1.0 + jnp.exp(-(xl + xg + b_ref[...])))               # (1, HW)
    o_ref[0] = x + (r - x) * wei          # == x * (1 - wei) + r * wei


def _absdiff_sum_kernel(x_ref, r_ref, o_ref):
    """Per-batch, per-channel sum of |x - r| over the HW-tile axis.

    x_ref, r_ref : (1, C, T)    o_ref : (1, C, 1) resident across HW tiles.
    """
    @pl.when(pl.program_id(1) == 0)
    def _():
        o_ref[...] = jnp.zeros_like(o_ref)

    o_ref[...] += jnp.sum(jnp.abs(x_ref[...] - r_ref[...]), axis=2, keepdims=True)


def _blend_kernel(x_ref, r_ref, wl_ref, g_ref, o_ref):
    """Fused |x-r| -> local 1x1 -> + global scalar -> sigmoid -> blend.

    x_ref, r_ref, o_ref : (1, C, T)
    wl_ref              : (1, C)      folded local 1x1 weight
    g_ref               : (1, 1, 1)   per-batch global gate + folded biases
    """
    x = x_ref[0]
    r = r_ref[0]
    xa = jnp.abs(x - r)
    xl = jnp.dot(wl_ref[...], xa, preferred_element_type=jnp.float32)   # (1, T)
    wei = 1.0 / (1.0 + jnp.exp(-(xl + g_ref[0])))                       # (1, T)
    o_ref[0] = x + (r - x) * wei


# ---------------------------------------------------------------------------
# Wrapper
# ---------------------------------------------------------------------------
def aff_forward(params, x, residual, *, force_two_pass=False, max_hw_tile=None):
    """AFF forward.  x, residual: (N, C, H, W) float32 -> (N, C, H, W)."""
    N, C, H, W = x.shape
    hw = H * W
    xf = x.reshape(N, C, hw)          # free reshape (contiguous trailing dims)
    rf = residual.reshape(N, C, hw)

    wl, bl = params["wl"], params["bl"]       # (C, 1), ()
    wg, bg = params["wg"], params["bg"]       # (C, 1), ()
    bias = bl + bg

    single = (not force_two_pass) and _block_cost(C, hw) <= _BLOCK_BYTES_BUDGET

    if single:
        # ---- single pass: x / residual read from HBM exactly once --------
        w2 = jnp.concatenate(
            [wl.reshape(1, C), wg.reshape(1, C) / float(hw)], axis=0)   # (2, C)
        out = pl.pallas_call(
            _aff_single_kernel,
            out_shape=jax.ShapeDtypeStruct((N, C, hw), jnp.float32),
            grid=(N,),
            in_specs=[pl.BlockSpec((1, C, hw), lambda n: (n, 0, 0)),
                      pl.BlockSpec((1, C, hw), lambda n: (n, 0, 0)),
                      pl.BlockSpec((2, C), lambda n: (0, 0)),
                      pl.BlockSpec((1, 1), lambda n: (0, 0))],
            out_specs=pl.BlockSpec((1, C, hw), lambda n: (n, 0, 0)),
            compiler_params=pltpu.CompilerParams(
                dimension_semantics=("parallel",),
                vmem_limit_bytes=_VMEM_LIMIT),
        )(xf, rf, w2, bias.reshape(1, 1))
        return out.reshape(N, C, H, W)

    # ---- two-pass tiled fallback (image pair does not fit VMEM) ----------
    t = _pick_hw_tile(hw, C, max_hw_tile)
    hw_p = hw
    if t == 0:
        # Rare case: H*W not a multiple of 128 -> pad the lane axis (costs one
        # extra HBM copy of x and residual; padded |x-r| contributions are 0).
        hw_p = _round_up(hw, 128)
        pad = hw_p - hw
        xf = jnp.pad(xf, ((0, 0), (0, 0), (0, pad)))
        rf = jnp.pad(rf, ((0, 0), (0, 0), (0, pad)))
        t = _pick_hw_tile(hw_p, C, max_hw_tile)
    n_t = hw_p // t

    # pass A: per-batch, per-channel sum of |x - r|.
    # (On v7x with N == 1 this reduction could additionally be split over a
    #  second "parallel" axis so both TensorCores are busy.)
    s = pl.pallas_call(
        _absdiff_sum_kernel,
        out_shape=jax.ShapeDtypeStruct((N, C, 1), jnp.float32),
        grid=(N, n_t),
        in_specs=[pl.BlockSpec((1, C, t), lambda n, i: (n, 0, i)),
                  pl.BlockSpec((1, C, t), lambda n, i: (n, 0, i))],
        out_specs=pl.BlockSpec((1, C, 1), lambda n, i: (n, 0, 0)),
        compiler_params=pltpu.CompilerParams(
            dimension_semantics=("parallel", "arbitrary"),
            vmem_limit_bytes=_VMEM_LIMIT),
    )(xf, rf)

    # per-batch global gate scalar (tiny, computed once outside the kernels).
    xg = jnp.einsum("nc,c->n", s[:, :, 0], wg[:, 0]) / float(hw)
    gate = (xg + bias).reshape(N, 1, 1)

    # pass B: fused |x-r| -> local 1x1 -> + global scalar -> sigmoid -> blend.
    out = pl.pallas_call(
        _blend_kernel,
        out_shape=jax.ShapeDtypeStruct((N, C, hw_p), jnp.float32),
        grid=(N, n_t),
        in_specs=[pl.BlockSpec((1, C, t), lambda n, i: (n, 0, i)),
                  pl.BlockSpec((1, C, t), lambda n, i: (n, 0, i)),
                  pl.BlockSpec((1, C), lambda n, i: (0, 0)),
                  pl.BlockSpec((1, 1, 1), lambda n, i: (n, 0, 0))],
        out_specs=pl.BlockSpec((1, C, t), lambda n, i: (n, 0, i)),
        compiler_params=pltpu.CompilerParams(
            dimension_semantics=("parallel", "parallel"),
            vmem_limit_bytes=_VMEM_LIMIT),
    )(xf, rf, wl.reshape(1, C), gate)

    if hw_p != hw:
        out = out[:, :, :hw]
    return out.reshape(N, C, H, W)


# ---------------------------------------------------------------------------
# Parameter handling (PyTorch-shaped raw params -> folded kernel params)
# ---------------------------------------------------------------------------
def _bn_fold(w, b, bn, eps=1e-5):
    """Fold eval-mode BatchNorm2d(1) into the preceding 1x1 conv (C -> 1)."""
    scale = bn["gamma"] / jnp.sqrt(bn["var"] + eps)            # (1,)
    w_f = (w.reshape(1, -1) * scale[:, None]).reshape(-1, 1)   # (C, 1)
    b_f = (b - bn["mean"]) * scale + bn["beta"]                # (1,)
    return w_f, b_f.reshape(())


def prepare_aff_params(raw):
    wl, bl = _bn_fold(raw["local_w"], raw["local_b"], raw["local_bn"])
    wg, bg = _bn_fold(raw["global_w"], raw["global_b"], raw["global_bn"])
    return {"wl": wl, "bl": bl, "wg": wg, "bg": bg}


def init_aff_raw_params(key, channels=64):
    ks = iter(jax.random.split(key, 16))

    def nrm(shape):
        return jax.random.normal(next(ks), shape, jnp.float32)

    def bn_params():
        return {"gamma": 1.0 + 0.1 * nrm((1,)),
                "beta": 0.1 * nrm((1,)),
                "mean": 0.1 * nrm((1,)),
                "var": 1.0 + 0.1 * jnp.abs(nrm((1,)))}

    std = (2.0 / channels) ** 0.5
    # TODO(synk): training-mode BatchNorm (batch statistics) not implemented;
    # eval-mode running stats are folded into the 1x1 convs.
    return {"local_w": std * nrm((1, channels, 1, 1)),
            "local_b": 0.01 * nrm((1,)),
            "local_bn": bn_params(),
            "global_w": std * nrm((1, channels, 1, 1)),
            "global_b": 0.01 * nrm((1,)),
            "global_bn": bn_params()}


# ---------------------------------------------------------------------------
# Pure-JAX reference (mirrors the PyTorch eval-mode forward)
# ---------------------------------------------------------------------------
def aff_reference(raw, x, residual, eps=1e-5):
    def conv1x1(z, w, b):
        return (jnp.einsum("nchw,oc->nohw", z, w.reshape(1, -1))
                + b.reshape(1, -1, 1, 1))

    def bn(z, p):
        return (p["gamma"].reshape(1, -1, 1, 1)
                * (z - p["mean"].reshape(1, -1, 1, 1))
                / jnp.sqrt(p["var"].reshape(1, -1, 1, 1) + eps)
                + p["beta"].reshape(1, -1, 1, 1))

    xa = jnp.abs(x - residual)
    xl = bn(conv1x1(xa, raw["local_w"], raw["local_b"]), raw["local_bn"])
    xg = bn(conv1x1(jnp.mean(xa, axis=(2, 3), keepdims=True),
                    raw["global_w"], raw["global_b"]), raw["global_bn"])
    wei = jax.nn.sigmoid(xl + xg)
    return x * (1.0 - wei) + residual * wei


# ---------------------------------------------------------------------------
if __name__ == "__main__":
    N, C, H, W = 2, 64, 16, 16          # AFF default channels=64

    key = jax.random.PRNGKey(0)
    kp, kx, kr = jax.random.split(key, 3)
    raw = init_aff_raw_params(kp, C)
    params = prepare_aff_params(raw)
    x = jax.random.normal(kx, (N, C, H, W), jnp.float32)
    residual = jax.random.normal(kr, (N, C, H, W), jnp.float32)

    ref = aff_reference(raw, x, residual)

    # default path: single fused kernel (image pair fits VMEM)
    out = jax.jit(aff_forward)(params, x, residual)
    jax.block_until_ready(out)
    assert out.shape == (N, C, H, W), out.shape
    assert bool(jnp.all(jnp.isfinite(out)))
    err = float(jnp.max(jnp.abs(out - ref)))
    assert err < 1e-4, f"single-pass max abs error {err}"

    # fallback path: two-pass tiled (exercised explicitly with a small tile)
    two_pass = jax.jit(functools.partial(aff_forward,
                                         force_two_pass=True, max_hw_tile=128))
    out2 = two_pass(params, x, residual)
    jax.block_until_ready(out2)
    err2 = float(jnp.max(jnp.abs(out2 - ref)))
    assert err2 < 1e-4, f"two-pass max abs error {err2}"

    print("KERNEL_OK")
</pallas_src>

<mosaic_0001>
module attributes {stable_mosaic.version = 11 : i64} {
  func.func @_aff_single_kernel(%arg0: i32, %arg1: memref<1x64x256xf32, #tpu.memory_space<vmem>>, %arg2: memref<1x64x256xf32, #tpu.memory_space<vmem>>, %arg3: memref<2x64xf32, #tpu.memory_space<vmem>>, %arg4: memref<1x1xf32, #tpu.memory_space<vmem>>, %arg5: memref<1x64x256xf32, #tpu.memory_space<vmem>>) attributes {dimension_semantics = [#tpu.dimension_semantics<parallel>], iteration_bounds = array<i64: 2>, scalar_prefetch = 0 : i64, scratch_operands = 0 : i64, tpu.core_type = #tpu.core_type<tc>, window_params = [{transform_indices = @transform_0, window_bounds = array<i64: 1, 64, 256>}, {transform_indices = @transform_1, window_bounds = array<i64: 1, 64, 256>}, {pipeline_mode = #tpu.pipeline_mode<synchronous>, transform_indices = @transform_2, window_bounds = array<i64: 2, 64>}, {pipeline_mode = #tpu.pipeline_mode<synchronous>, transform_indices = @transform_3, window_bounds = array<i64: 1, 1>}, {transform_indices = @transform_4, window_bounds = array<i64: 1, 64, 256>}]} {
    %c0 = arith.constant 0 : index
    %c0_0 = arith.constant 0 : index
    %c0_1 = arith.constant 0 : index
    %0 = vector.load %arg1[%c0, %c0_0, %c0_1] : memref<1x64x256xf32, #tpu.memory_space<vmem>>, vector<1x64x256xf32>
    %1 = vector.shape_cast %0 : vector<1x64x256xf32> to vector<64x256xf32>
    %c0_2 = arith.constant 0 : index
    %c0_3 = arith.constant 0 : index
    %c0_4 = arith.constant 0 : index
    %2 = vector.load %arg2[%c0_2, %c0_3, %c0_4] : memref<1x64x256xf32, #tpu.memory_space<vmem>>, vector<1x64x256xf32>
    %3 = vector.shape_cast %2 : vector<1x64x256xf32> to vector<64x256xf32>
    %4 = arith.subf %1, %3 : vector<64x256xf32>
    %5 = math.absf %4 : vector<64x256xf32>
    %c0_5 = arith.constant 0 : index
    %c0_6 = arith.constant 0 : index
    %6 = vector.load %arg3[%c0_5, %c0_6] : memref<2x64xf32, #tpu.memory_space<vmem>>, vector<2x64xf32>
    %cst = arith.constant dense<0.000000e+00> : vector<2x256xf32>
    %7 = tpu.matmul %6, %5, %cst {dimension_numbers = #tpu.dot_dimension_numbers<[1], [0], [0], [1], [0, 0, 1, 1], [], []>} : vector<2x64xf32>, vector<64x256xf32>, vector<2x256xf32> -> vector<2x256xf32>
    %8 = vector.extract_strided_slice %7 {offsets = [0, 0], sizes = [1, 256], strides = [1, 1]} : vector<2x256xf32> to vector<1x256xf32>
    %9 = vector.extract_strided_slice %7 {offsets = [1, 0], sizes = [1, 256], strides = [1, 1]} : vector<2x256xf32> to vector<1x256xf32>
    %cst_7 = arith.constant dense<0.000000e+00> : vector<1xf32>
    %10 = vector.multi_reduction <add>, %9, %cst_7 [1] : vector<1x256xf32> to vector<1xf32>
    %11 = vector.shape_cast %10 : vector<1xf32> to vector<1x1xf32>
    %12 = vector.broadcast %11 : vector<1x1xf32> to vector<1x256xf32>
    %13 = arith.addf %8, %12 : vector<1x256xf32>
    %c0_8 = arith.constant 0 : index
    %c0_9 = arith.constant 0 : index
    %14 = vector.load %arg4[%c0_8, %c0_9] : memref<1x1xf32, #tpu.memory_space<vmem>>, vector<1x1xf32>
    %15 = vector.broadcast %14 : vector<1x1xf32> to vector<1x256xf32>
    %16 = arith.addf %13, %15 : vector<1x256xf32>
    %cst_10 = arith.constant 0.000000e+00 : f32
    %17 = vector.broadcast %cst_10 : f32 to vector<1x256xf32>
    %18 = arith.subf %17, %16 : vector<1x256xf32>
    %19 = math.exp %18 : vector<1x256xf32>
    %cst_11 = arith.constant 1.000000e+00 : f32
    %20 = vector.broadcast %cst_11 : f32 to vector<1x256xf32>
    %21 = arith.addf %20, %19 : vector<1x256xf32>
    %cst_12 = arith.constant 1.000000e+00 : f32
    %22 = vector.broadcast %cst_12 : f32 to vector<1x256xf32>
    %23 = arith.divf %22, %21 : vector<1x256xf32>
    %24 = arith.subf %3, %1 : vector<64x256xf32>
    %25 = vector.broadcast %23 : vector<1x256xf32> to vector<64x256xf32>
    %26 = arith.mulf %24, %25 : vector<64x256xf32>
    %27 = arith.addf %1, %26 : vector<64x256xf32>
    %c0_13 = arith.constant 0 : index
    %c0_14 = arith.constant 0 : index
    %c0_15 = arith.constant 0 : index
    %28 = vector.load %arg5[%c0_13, %c0_14, %c0_15] : memref<1x64x256xf32, #tpu.memory_space<vmem>>, vector<1x64x256xf32>
    %29 = vector.shape_cast %28 : vector<1x64x256xf32> to vector<64x256xf32>
    %30 = vector.shape_cast %27 : vector<64x256xf32> to vector<1x64x256xf32>
    tpu.vector_store %arg5[%c0_13, %c0_14, %c0_15], %30 {strides = array<i32>} : memref<1x64x256xf32, #tpu.memory_space<vmem>>, vector<1x64x256xf32>,
    return
  }
  func.func @transform_0(%arg0: i32) -> (i32, i32, i32) {
    %c0_i32 = arith.constant 0 : i32
    %c0_i32_0 = arith.constant 0 : i32
    %c0_i32_1 = arith.constant 0 : i32
    return %arg0, %c0_i32, %c0_i32_0 : i32, i32, i32
  }
  func.func @transform_1(%arg0: i32) -> (i32, i32, i32) {
    %c0_i32 = arith.constant 0 : i32
    %c0_i32_0 = arith.constant 0 : i32
    %c0_i32_1 = arith.constant 0 : i32
    return %arg0, %c0_i32, %c0_i32_0 : i32, i32, i32
  }
  func.func @transform_2(%arg0: i32) -> (i32, i32) {
    %c0_i32 = arith.constant 0 : i32
    %c0_i32_0 = arith.constant 0 : i32
    %c0_i32_1 = arith.constant 0 : i32
    return %c0_i32, %c0_i32_0 : i32, i32
  }
  func.func @transform_3(%arg0: i32) -> (i32, i32) {
    %c0_i32 = arith.constant 0 : i32
    %c0_i32_0 = arith.constant 0 : i32
    %c0_i32_1 = arith.constant 0 : i32
    return %c0_i32, %c0_i32_0 : i32, i32
  }
  func.func @transform_4(%arg0: i32) -> (i32, i32, i32) {
    %c0_i32 = arith.constant 0 : i32
    %c0_i32_0 = arith.constant 0 : i32
    %c0_i32_1 = arith.constant 0 : i32
    return %arg0, %c0_i32, %c0_i32_0 : i32, i32, i32
  }
}

</mosaic_0001>

<llo_original>
// kernel: aff_forward.1
$region0: #{aff_forward.1}
  #allocation0 [shape = 'u32[]', space=smem, size = 0x4, offset = 0x4, fixed_abs, tag = 'smem constant byte address 0x4 - core index']
  #allocation1 [shape = 'u32[144,128]{1,0:T(1,128)}', space=vmem, size = 0x12000, scoped, tag = 'internal scratch']
  #allocation2 [shape = 'f32[1,1]{1,0:T(1,128)S(1)}', space=vmem, size = 0x200, scoped, tag = 'scoped memory for aff_forward.1']
  %s0 = inlined_call_operand.vmem [shape: f32[2,64,256], index: 0, kind: input, shape index: {}]
  %s1 = inlined_call_operand.vmem [shape: f32[2,64,256], index: 1, kind: input, shape index: {}]
  %s2 = inlined_call_operand.vmem [shape: f32[2,64], index: 2, kind: input, shape index: {}]
  %s3 = inlined_call_operand.<no memory space> [shape: f32[1,1], index: 3, kind: input, shape index: {}]
  %s4 = inlined_call_operand.vmem [shape: f32[2,64,256], index: 4, kind: output, shape index: {}]
  %s5 = sld [smem:[#allocation0]]
  $region49: #{aff_forward.1} parent=0
    _
  %s7 = ssub.s32 1, %s5
  %s8 = scalar_select 0, %s7, %s5
  %v9 = vstv %s3
  %10 = vst [vmem:[#allocation2] sm:$0x1] %v9
  loop: start=0, step=1, limit=4
  $region2: #{aff_forward.1} parent=0 // loop_pre_header
    _
  $region3: #{aff_forward.1} parent=0 // loop_header
    %s12 = sphi 0, %s16
    %p13 = scmp.ge.s32.totalorder %s12, 4
    %s22 = sphi 0, %s24
    %s25 = sphi 0, %s22
    %s26 = sphi 0, %s25
    %s42 = sphi 0, %s26
    %s48 = sphi 0, %s50
    %s51 = sphi 0, %s48
    %s52 = sphi 0, %s51
    %s68 = sphi 0, %s52
    %s72 = sphi 0, %s72
    %s74 = sphi 0, %s72
    %s75 = sphi 0, %s74
    %s89 = sphi 0, %s75
    %s93 = sphi 0, %s93
    %s95 = sphi 0, %s93
    %s96 = sphi 0, %s95
    %s110 = sphi 0, %s96
    %s116 = sphi 0, %s118
    %s119 = sphi 0, %s116
    %s120 = sphi 0, %s119
    %s136 = sphi 0, %s120
  $region4: #{aff_forward.1} parent=0 // loop_header_branch
    %15 = sbr.rel (%p13) target = $region8
  $region5: #{aff_forward.1} parent=0 // loop_body
    %s17 = ssub.s32 %s12, 1
    %s18 = ssub.s32 %s12, 2
    %s19 = sadd.s32 %s12, 1
    %s20 = ssub.s32 %s12, %s19
    %p21 = scmp.eq.s32.totalorder %s20, 0
    %s23 = sadd.s32 %s22, 1
    %s24 = scalar_select %p21, %s22, %s23
    %p27 = pneg %p21
    %p28 = scmp.eq.s32.totalorder %s12, 1
    %p29 = por %p27, %p28
    %p30 = scmp.ne.s32.totalorder %s22, %s25
    %p31 = scmp.eq.s32.totalorder %s12, 0
    %p32 = por %p30, %p31
    %p33 = scmp.ne.s32.totalorder %s22, %s25
    %p34 = scmp.eq.s32.totalorder %s17, 1
    %p35 = por %p33, %p34
    %p36 = scmp.ne.s32.totalorder %s25, %s26
    %p37 = scmp.eq.s32.totalorder %s17, 0
    %p38 = por %p36, %p37
    %p39 = scmp.ne.s32.totalorder %s25, %s26
    %p40 = scmp.eq.s32.totalorder %s18, 1
    %p41 = por %p39, %p40
    %p43 = scmp.ne.s32.totalorder %s26, %s42
    %p44 = scmp.eq.s32.totalorder %s18, 0
    %p45 = por %p43, %p44
    %s46 = ssub.s32 %s12, %s19
    %p47 = scmp.eq.s32.totalorder %s46, 0
    %s49 = sadd.s32 %s48, 1
    %s50 = scalar_select %p47, %s48, %s49
    %p53 = pneg %p47
    %p54 = scmp.eq.s32.totalorder %s12, 1
    %p55 = por %p53, %p54
    %p56 = scmp.ne.s32.totalorder %s48, %s51
    %p57 = scmp.eq.s32.totalorder %s12, 0
    %p58 = por %p56, %p57
    %p59 = scmp.ne.s32.totalorder %s48, %s51
    %p60 = scmp.eq.s32.totalorder %s17, 1
    %p61 = por %p59, %p60
    %p62 = scmp.ne.s32.totalorder %s51, %s52
    %p63 = scmp.eq.s32.totalorder %s17, 0
    %p64 = por %p62, %p63
    %p65 = scmp.ne.s32.totalorder %s51, %s52
    %p66 = scmp.eq.s32.totalorder %s18, 1
    %p67 = por %p65, %p66
    %p69 = scmp.ne.s32.totalorder %s52, %s68
    %p70 = scmp.eq.s32.totalorder %s18, 0
    %p71 = por %p69, %p70
    %s73 = sadd.s32 %s72, 1
    %p76 = scmp.eq.s32.totalorder %s12, 1
    %p77 = scmp.ne.s32.totalorder %s72, %s74
    %p78 = scmp.eq.s32.totalorder %s12, 0
    %p79 = por %p77, %p78
    %p80 = scmp.ne.s32.totalorder %s72, %s74
    %p81 = scmp.eq.s32.totalorder %s17, 1
    %p82 = por %p80, %p81
    %p83 = scmp.ne.s32.totalorder %s74, %s75
    %p84 = scmp.eq.s32.totalorder %s17, 0
    %p85 = por %p83, %p84
    %p86 = scmp.ne.s32.totalorder %s74, %s75
    %p87 = scmp.eq.s32.totalorder %s18, 1
    %p88 = por %p86, %p87
    %p90 = scmp.ne.s32.totalorder %s75, %s89
    %p91 = scmp.eq.s32.totalorder %s18, 0
    %p92 = por %p90, %p91
    %s94 = sadd.s32 %s93, 1
    %p97 = scmp.eq.s32.totalorder %s12, 1
    %p98 = scmp.ne.s32.totalorder %s93, %s95
    %p99 = scmp.eq.s32.totalorder %s12, 0
    %p100 = por %p98, %p99
    %p101 = scmp.ne.s32.totalorder %s93, %s95
    %p102 = scmp.eq.s32.totalorder %s17, 1
    %p103 = por %p101, %p102
    %p104 = scmp.ne.s32.totalorder %s95, %s96
    %p105 = scmp.eq.s32.totalorder %s17, 0
    %p106 = por %p104, %p105
    %p107 = scmp.ne.s32.totalorder %s95, %s96
    %p108 = scmp.eq.s32.totalorder %s18, 1
    %p109 = por %p107, %p108
    %p111 = scmp.ne.s32.totalorder %s96, %s110
    %p112 = scmp.eq.s32.totalorder %s18, 0
    %p113 = por %p111, %p112
    %s114 = ssub.s32 %s12, %s19
    %p115 = scmp.eq.s32.totalorder %s114, 0
    %s117 = sadd.s32 %s116, 1
    %s118 = scalar_select %p115, %s116, %s117
    %p121 = pneg %p115
    %p122 = scmp.eq.s32.totalorder %s12, 1
    %p123 = por %p121, %p122
    %p124 = scmp.ne.s32.totalorder %s116, %s119
    %p125 = scmp.eq.s32.totalorder %s12, 0
    %p126 = por %p124, %p125
    %p127 = scmp.ne.s32.totalorder %s116, %s119
    %p128 = scmp.eq.s32.totalorder %s17, 1
    %p129 = por %p127, %p128
    %p130 = scmp.ne.s32.totalorder %s119, %s120
    %p131 = scmp.eq.s32.totalorder %s17, 0
    %p132 = por %p130, %p131
    %p133 = scmp.ne.s32.totalorder %s119, %s120
    %p134 = scmp.eq.s32.totalorder %s18, 1
    %p135 = por %p133, %p134
    %p137 = scmp.ne.s32.totalorder %s120, %s136
    %p138 = scmp.eq.s32.totalorder %s18, 0
    %p139 = por %p137, %p138
    %p140 = scmp.le.s32.totalorder 1, %s12
    %p141 = scmp.lt.s32.totalorder %s12, 3
    %p142 = pnand %p140, %p141
    %p143 = pneg %p142
    // Predicated region
    $region9: #{aff_forward.1} parent=5 // pred_check
      _
    $region10: #{aff_forward.1} parent=5 // pred_check_branch
      %145 = sbr.rel (%p142) target = $region12
    $region11: #{aff_forward.1} parent=5 // pred_region
      %s146 = ssub.s32 %s12, 1
      // Predicated region
      $region13: #{aff_forward.1} parent=11 // pred_check
        %p147 = pneg %p85
      $region14: #{aff_forward.1} parent=11 // pred_check_branch
        %149 = sbr.rel (%p147) target = $region16
      $region15: #{aff_forward.1} parent=11 // pred_region
        _
      $region16: #{aff_forward.1} parent=11 // pred_fallthru
        _
      // Predicated region
      $region17: #{aff_forward.1} parent=11 // pred_check
        %p150 = pneg %p106
      $region18: #{aff_forward.1} parent=11 // pred_check_branch
        %152 = sbr.rel (%p150) target = $region20
      $region19: #{aff_forward.1} parent=11 // pred_region
        _
      $region20: #{aff_forward.1} parent=11 // pred_fallthru
        _
    $region12: #{aff_forward.1} parent=5 // pred_fallthru
      _
    %p153 = scmp.lt.s32.totalorder %s12, 2
    // Predicated region
    $region21: #{aff_forward.1} parent=5 // pred_check
      %p154 = pneg %p153
    $region22: #{aff_forward.1} parent=5 // pred_check_branch
      %156 = sbr.rel (%p154) target = $region24
    $region23: #{aff_forward.1} parent=5 // pred_region
      // Predicated region
      $region25: #{aff_forward.1} parent=23 // pred_check
        %p157 = pneg %p32
      $region26: #{aff_forward.1} parent=23 // pred_check_branch
        %159 = sbr.rel (%p157) target = $region28
      $region27: #{aff_forward.1} parent=23 // pred_region
        %p160 = scmp.lt.s32.totalorder %s12, 1
        %s161 = scalar_select %p160, %s12, 1
        %s162 = smul.addr %s161, 16
        %s163 = smul.addr %s162, 8
        %s164 = scalar_lea.vmem %s0, %s163
      $region28: #{aff_forward.1} parent=23 // pred_fallthru
        _
      // Predicated region
      $region29: #{aff_forward.1} parent=23 // pred_check
        %p165 = pneg %p58
      $region30: #{aff_forward.1} parent=23 // pred_check_branch
        %167 = sbr.rel (%p165) target = $region32
      $region31: #{aff_forward.1} parent=23 // pred_region
        %p168 = scmp.lt.s32.totalorder %s12, 1
        %s169 = scalar_select %p168, %s12, 1
        %s170 = smul.addr %s169, 16
        %s171 = smul.addr %s170, 8
        %s172 = scalar_lea.vmem %s1, %s171
      $region32: #{aff_forward.1} parent=23 // pred_fallthru
        _
    $region24: #{aff_forward.1} parent=5 // pred_fallthru
      _
    %p173 = scmp.le.s32.totalorder 1, %s12
    %p174 = scmp.lt.s32.totalorder %s12, 3
    %p175 = pnand %p173, %p174
    %p176 = pneg %p175
    // Predicated region
    $region33: #{aff_forward.1} parent=5 // pred_check
      _
    $region34: #{aff_forward.1} parent=5 // pred_check_branch
      %178 = sbr.rel (%p175) target = $region36
    $region35: #{aff_forward.1} parent=5 // pred_region
      %s179 = ssub.s32 %s12, 1
      %p180 = scmp.lt.s32.totalorder %s17, 1
      %s181 = scalar_select %p180, %s17, 1
      %s182 = smul.addr %s181, 16
      %s183 = smul.addr %s182, 8
      %s184 = scalar_lea.vmem %s0, %s183
      %p185 = pneg %p38
      %p186 = pneg %p35
      %p187 = scmp.lt.s32.totalorder %s17, 1
      %s188 = scalar_select %p187, %s17, 1
      %s189 = smul.addr %s188, 16
      %s190 = smul.addr %s189, 8
      %s191 = scalar_lea.vmem %s1, %s190
      %p192 = pneg %p64
      %p193 = pneg %p61
      %p194 = pneg %p85
      %p195 = pneg %p82
      %p196 = pneg %p106
      %p197 = pneg %p103
      %p198 = pneg %p132
      %p199 = pneg %p129
      %p200 = scmp.lt.s32.totalorder %s17, 1
      %s201 = scalar_select %p200, %s17, 1
      %s202 = smul.addr %s201, 16
      %s203 = smul.addr %s202, 8
      %s204 = scalar_lea.vmem %s4, %s203
      %p205 = scmp.lt.s32.totalorder %s17, 1
      %s206 = scalar_select %p205, %s17, 1
      %s207 = smul.addr %s206, 16
      %s208 = smul.addr %s207, 8
      %s209 = scalar_lea.vmem %s0, %s208
      %p210 = scmp.lt.s32.totalorder %s17, 1
      %s211 = scalar_select %p210, %s17, 1
      %s212 = smul.addr %s211, 16
      %s213 = smul.addr %s212, 8
      %s214 = scalar_lea.vmem %s1, %s213
      %p215 = scmp.lt.s32.totalorder %s17, 1
      %s216 = scalar_select %p215, %s17, 1
      %s217 = smul.addr %s216, 16
      %s218 = smul.addr %s217, 8
      %s219 = scalar_lea.vmem %s4, %s218
      %v220 = vld [vmem:[%s209] sm:$0xff]
      %v221 = vld [vmem:[%s209 + $0x8] sm:$0xff]
      %v222 = vld [vmem:[%s209 + $0x10] sm:$0xff]
      %v223 = vld [vmem:[%s209 + $0x18] sm:$0xff]
      %v224 = vld [vmem:[%s209 + $0x20] sm:$0xff]
      %v225 = vld [vmem:[%s209 + $0x28] sm:$0xff]
      %v226 = vld [vmem:[%s209 + $0x30] sm:$0xff]
      %v227 = vld [vmem:[%s209 + $0x38] sm:$0xff]
      %v228 = vld [vmem:[%s209 + $0x40] sm:$0xff]
      %v229 = vld [vmem:[%s209 + $0x48] sm:$0xff]
      %v230 = vld [vmem:[%s209 + $0x50] sm:$0xff]
      %v231 = vld [vmem:[%s209 + $0x58] sm:$0xff]
      %v232 = vld [vmem:[%s209 + $0x60] sm:$0xff]
      %v233 = vld [vmem:[%s209 + $0x68] sm:$0xff]
      %v234 = vld [vmem:[%s209 + $0x70] sm:$0xff]
      %v235 = vld [vmem:[%s209 + $0x78] sm:$0xff]
      %v236 = vld [vmem:[%s214] sm:$0xff]
      %v237 = vld [vmem:[%s214 + $0x8] sm:$0xff]
      %v238 = vld [vmem:[%s214 + $0x10] sm:$0xff]
      %v239 = vld [vmem:[%s214 + $0x18] sm:$0xff]
      %v240 = vld [vmem:[%s214 + $0x20] sm:$0xff]
      %v241 = vld [vmem:[%s214 + $0x28] sm:$0xff]
      %v242 = vld [vmem:[%s214 + $0x30] sm:$0xff]
      %v243 = vld [vmem:[%s214 + $0x38] sm:$0xff]
      %v244 = vld [vmem:[%s214 + $0x40] sm:$0xff]
      %v245 = vld [vmem:[%s214 + $0x48] sm:$0xff]
      %v246 = vld [vmem:[%s214 + $0x50] sm:$0xff]
      %v247 = vld [vmem:[%s214 + $0x58] sm:$0xff]
      %v248 = vld [vmem:[%s214 + $0x60] sm:$0xff]
      %v249 = vld [vmem:[%s214 + $0x68] sm:$0xff]
      %v250 = vld [vmem:[%s214 + $0x70] sm:$0xff]
      %v251 = vld [vmem:[%s214 + $0x78] sm:$0xff]
      %v252 = vsub.f32 %v220, %v236
      %v253 = vsub.f32 %v221, %v237
      %v254 = vsub.f32 %v222, %v238
      %v255 = vsub.f32 %v223, %v239
      %v256 = vsub.f32 %v224, %v240
      %v257 = vsub.f32 %v225, %v241
      %v258 = vsub.f32 %v226, %v242
      %v259 = vsub.f32 %v227, %v243
      %v260 = vsub.f32 %v228, %v244
      %v261 = vsub.f32 %v229, %v245
      %v262 = vsub.f32 %v230, %v246
      %v263 = vsub.f32 %v231, %v247
      %v264 = vsub.f32 %v232, %v248
      %v265 = vsub.f32 %v233, %v249
      %v266 = vsub.f32 %v234, %v250
      %v267 = vsub.f32 %v235, %v251
      %v268 = vand.u32 2147483647, %v252
      %v269 = vand.u32 2147483647, %v253
      %v270 = vand.u32 2147483647, %v254
      %v271 = vand.u32 2147483647, %v255
      %v272 = vand.u32 2147483647, %v256
      %v273 = vand.u32 2147483647, %v257
      %v274 = vand.u32 2147483647, %v258
      %v275 = vand.u32 2147483647, %v259
      %v276 = vand.u32 2147483647, %v260
      %v277 = vand.u32 2147483647, %v261
      %v278 = vand.u32 2147483647, %v262
      %v279 = vand.u32 2147483647, %v263
      %v280 = vand.u32 2147483647, %v264
      %v281 = vand.u32 2147483647, %v265
      %v282 = vand.u32 2147483647, %v266
      %v283 = vand.u32 2147483647, %v267
      %v284 = vld [vmem:[%s2] sm:$0x3]
      %vm285 = vcmask 523264
      %v287 = vsel %vm285, %v284, 0
      %289 = vmatprep.subr.mxu0 0.0
      %290 = vmatpush1.msra.mxu0 0.0
      %291 = vmatprep.subr.mxu0 0.0
      %292 = vmatpush1.msra.mxu0 0.0
      %293 = vmatprep.subr.mxu0 0.0
      %294 = vmatpush1.msra.mxu0 0.0
      %295 = vmatprep.subr.mxu0 0.0
      %296 = vmatpush1.msra.mxu0 0.0
      %297 = vmatprep.subr.mxu0 0.0
      %298 = vmatpush1.msra.mxu0 0.0
      %299 = vmatprep.subr.mxu0 0.0
      %300 = vmatpush1.msra.mxu0 0.0
      %301 = vmatprep.subr.mxu0 0.0
      %302 = vmatpush1.msra.mxu0 0.0
      %303 = vmatprep.subr.mxu0 0.0
      %304 = vmatpush1.msra.mxu0 0.0
      %305 = vmatprep.subr.mxu0 %v283
      %306 = vmatpush1.msra.mxu0 %v282
      %307 = vmatprep.subr.mxu0 %v281
      %308 = vmatpush1.msra.mxu0 %v280
      %309 = vmatprep.subr.mxu0 %v279
      %310 = vmatpush1.msra.mxu0 %v278
      %311 = vmatprep.subr.mxu0 %v277
      %312 = vmatpush1.msra.mxu0 %v276
      %313 = vmatprep.subr.mxu0 %v275
      %314 = vmatpush1.msra.mxu0 %v274
      %315 = vmatprep.subr.mxu0 %v273
      %316 = vmatpush1.msra.mxu0 %v272
      %317 = vmatprep.subr.mxu0 %v271
      %318 = vmatpush1.msra.mxu0 %v270
      %319 = vmatprep.subr.mxu0 %v269
      %320 = vmatpush1.msra.mxu0 %v268
      %321 = vmatprep.subr.mxu0 0.0
      %322 = vmatpush2.msra.mxu0 0.0
      %323 = vmatprep.subr.mxu0 0.0
      %324 = vmatpush2.msra.mxu0 0.0
      %325 = vmatprep.subr.mxu0 0.0
      %326 = vmatpush2.msra.mxu0 0.0
      %327 = vmatprep.subr.mxu0 0.0
      %328 = vmatpush2.msra.mxu0 0.0
      %329 = vmatprep.subr.mxu0 0.0
      %330 = vmatpush2.msra.mxu0 0.0
      %331 = vmatprep.subr.mxu0 0.0
      %332 = vmatpush2.msra.mxu0 0.0
      %333 = vmatprep.subr.mxu0 0.0
      %334 = vmatpush2.msra.mxu0 0.0
      %335 = vmatprep.subr.mxu0 0.0
      %336 = vmatpush2.msra.mxu0 0.0
      %337 = vmatprep.subr.mxu0 0.0
      %338 = vmatpush2.msra.mxu0 0.0
      %339 = vmatprep.subr.mxu0 0.0
      %340 = vmatpush2.msra.mxu0 0.0
      %341 = vmatprep.subr.mxu0 0.0
      %342 = vmatpush2.msra.mxu0 0.0
      %343 = vmatprep.subr.mxu0 0.0
      %344 = vmatpush2.msra.mxu0 0.0
      %345 = vmatprep.subr.mxu0 0.0
      %346 = vmatpush2.msra.mxu0 0.0
      %347 = vmatprep.subr.mxu0 0.0
      %348 = vmatpush2.msra.mxu0 0.0
      %349 = vmatprep.subr.mxu0 0.0
      %350 = vmatpush2.msra.mxu0 0.0
      %351 = vmatprep.subr.mxu0 0.0
      %352 = vmatpush2.msra.mxu0 0.0
      %353 = vmatprep.mubr.f32.mxu0 0.0
      %354 = vmatmul.mubr.f32.gmra.mxu0 %v287
      %v355 = vpop.f32.mrf.mxu0
      %v356 = vadd.f32 0.0, %v355
      %v357 = vpop.f32.mrf.mxu0
      %v358 = vadd.f32 0.0, %v357
      %359 = vdwg.mxu0
      %vm360 = vcmask 1041409
      %v361 = vsel %vm360, %v356, 0.0
      %v362 = vsel %vm360, %v358, 0.0
      %v363 = vadd.f32 %v361, %v362
      %364 = vadd.xlane.f32.xlu0 %v363
      %v365 = vpop.xlane.xlu0 %364
      %v367 = vrot.slane %v365, 1
      %v369 = vadd.f32 %v356, %v367
      %v370 = vadd.f32 %v358, %v367
      %v371 = vld [vmem:[#allocation2] sm:$0x1]
      %373 = vset.pattern.permute.xlu0 0
      %374 = vperm.xlu0 %373, %v371
      %v375 = vpop.permute.xlu0 %374
      %v377 = vlaneseq
      %v378 = vshrl.u32 %v377, 7
      %v379 = vsub.s32 0, %v378
      %v380 = vrot.slane %v375, %v379
      %v381 = vadd.f32 %v369, %v380
      %v382 = vadd.f32 %v370, %v380
      %v383 = vsub.f32 0.0, %v381
      %v384 = vsub.f32 0.0, %v382
      %v385 = vmul.f32 %v383, 1.442695
      %v386 = vpow.pop %v385
      %v387 = vmul.f32 %v384, 1.442695
      %v388 = vpow.pop %v387
      %v389 = vadd.f32 %v386, 1.0
      %v390 = vadd.f32 %v388, 1.0
      %v391 = vrcp.pop %v389
      %v392 = vmul.f32 1.0, %v391
      %v393 = vrcp.pop %v390
      %v394 = vmul.f32 1.0, %v393
      %v395 = vsub.f32 %v236, %v220
      %v396 = vsub.f32 %v237, %v221
      %v397 = vsub.f32 %v238, %v222
      %v398 = vsub.f32 %v239, %v223
      %v399 = vsub.f32 %v240, %v224
      %v400 = vsub.f32 %v241, %v225
      %v401 = vsub.f32 %v242, %v226
      %v402 = vsub.f32 %v243, %v227
      %v403 = vsub.f32 %v244, %v228
      %v404 = vsub.f32 %v245, %v229
      %v405 = vsub.f32 %v246, %v230
      %v406 = vsub.f32 %v247, %v231
      %v407 = vsub.f32 %v248, %v232
      %v408 = vsub.f32 %v249, %v233
      %v409 = vsub.f32 %v250, %v234
      %v410 = vsub.f32 %v251, %v235
      %v411 = vlaneseq
      %v412 = vshrl.u32 %v411, 7
      %v413 = vsub.s32 0, %v412
      %v414 = vrot.slane %v392, %v413
      %v415 = vlaneseq
      %v416 = vshrl.u32 %v415, 7
      %v417 = vsub.s32 0, %v416
      %v418 = vrot.slane %v394, %v417
      %v419 = vmul.f32 %v395, %v414
      %v420 = vmul.f32 %v396, %v418
      %v421 = vmul.f32 %v397, %v414
      %v422 = vmul.f32 %v398, %v418
      %v423 = vmul.f32 %v399, %v414
      %v424 = vmul.f32 %v400, %v418
      %v425 = vmul.f32 %v401, %v414
      %v426 = vmul.f32 %v402, %v418
      %v427 = vmul.f32 %v403, %v414
      %v428 = vmul.f32 %v404, %v418
      %v429 = vmul.f32 %v405, %v414
      %v430 = vmul.f32 %v406, %v418
      %v431 = vmul.f32 %v407, %v414
      %v432 = vmul.f32 %v408, %v418
      %v433 = vmul.f32 %v409, %v414
      %v434 = vmul.f32 %v410, %v418
      %v435 = vadd.f32 %v220, %v419
      %v436 = vadd.f32 %v221, %v420
      %v437 = vadd.f32 %v222, %v421
      %v438 = vadd.f32 %v223, %v422
      %v439 = vadd.f32 %v224, %v423
      %v440 = vadd.f32 %v225, %v424
      %v441 = vadd.f32 %v226, %v425
      %v442 = vadd.f32 %v227, %v426
      %v443 = vadd.f32 %v228, %v427
      %v444 = vadd.f32 %v229, %v428
      %v445 = vadd.f32 %v230, %v429
      %v446 = vadd.f32 %v231, %v430
      %v447 = vadd.f32 %v232, %v431
      %v448 = vadd.f32 %v233, %v432
      %v449 = vadd.f32 %v234, %v433
      %v450 = vadd.f32 %v235, %v434
      %451 = vst [vmem:[%s219] sm:$0xff] %v435
      %452 = vst [vmem:[%s219 + $0x8] sm:$0xff] %v436
      %453 = vst [vmem:[%s219 + $0x10] sm:$0xff] %v437
      %454 = vst [vmem:[%s219 + $0x18] sm:$0xff] %v438
      %455 = vst [vmem:[%s219 + $0x20] sm:$0xff] %v439
      %456 = vst [vmem:[%s219 + $0x28] sm:$0xff] %v440
      %457 = vst [vmem:[%s219 + $0x30] sm:$0xff] %v441
      %458 = vst [vmem:[%s219 + $0x38] sm:$0xff] %v442
      %459 = vst [vmem:[%s219 + $0x40] sm:$0xff] %v443
      %460 = vst [vmem:[%s219 + $0x48] sm:$0xff] %v444
      %461 = vst [vmem:[%s219 + $0x50] sm:$0xff] %v445
      %462 = vst [vmem:[%s219 + $0x58] sm:$0xff] %v446
      %463 = vst [vmem:[%s219 + $0x60] sm:$0xff] %v447
      %464 = vst [vmem:[%s219 + $0x68] sm:$0xff] %v448
      %465 = vst [vmem:[%s219 + $0x70] sm:$0xff] %v449
      %466 = vst [vmem:[%s219 + $0x78] sm:$0xff] %v450
      %p467 = scmp.lt.s32.totalorder %s17, 1
      %s468 = scalar_select %p467, %s17, 1
      %s469 = smul.addr %s468, 16
      %s470 = smul.addr %s469, 8
      %s471 = scalar_lea.vmem %s4, %s470
      // Predicated region
      $region37: #{aff_forward.1} parent=35 // pred_check
        %p472 = pneg %p129
      $region38: #{aff_forward.1} parent=35 // pred_check_branch
        %474 = sbr.rel (%p472) target = $region40
      $region39: #{aff_forward.1} parent=35 // pred_region
        _
      $region40: #{aff_forward.1} parent=35 // pred_fallthru
        _
    $region36: #{aff_forward.1} parent=5 // pred_fallthru
      _
    %p475 = scmp.le.s32.totalorder 2, %s12
    // Predicated region
    $region41: #{aff_forward.1} parent=5 // pred_check
      %p476 = pneg %p475
    $region42: #{aff_forward.1} parent=5 // pred_check_branch
      %478 = sbr.rel (%p476) target = $region44
    $region43: #{aff_forward.1} parent=5 // pred_region
      %s479 = ssub.s32 %s12, 2
      // Predicated region
      $region45: #{aff_forward.1} parent=43 // pred_check
        %p480 = pneg %p135
      $region46: #{aff_forward.1} parent=43 // pred_check_branch
        %482 = sbr.rel (%p480) target = $region48
      $region47: #{aff_forward.1} parent=43 // pred_region
        %p483 = scmp.lt.s32.totalorder %s18, 1
        %s484 = scalar_select %p483, %s18, 1
        %s485 = smul.addr %s484, 16
        %s486 = smul.addr %s485, 8
        %s487 = scalar_lea.vmem %s4, %s486
      $region48: #{aff_forward.1} parent=43 // pred_fallthru
        _
    $region44: #{aff_forward.1} parent=5 // pred_fallthru
      _
  $region6: #{aff_forward.1} parent=0 // loop_footer
    %s16 = sadd.s32 1, %s12
  $region7: #{aff_forward.1} parent=0 // loop_footer_branch
    %11 = sbr.rel target = $region3
  $region8: #{aff_forward.1} parent=0 // loop_exit
    _

</llo_original>
